<compile_context>
chip_gen: v5e
topology: v5e:2x2
jax: 0.10.0
libtpu: 0.0.40
codegen_flags: <defaults>
</compile_context>

<pallas_src>
import jax
import jax.numpy as jnp
from jax.experimental import pallas as pl
from jax.experimental.pallas import tpu as pltpu

HIDDEN = 16
INPUT_DIM = 1
NUM_LAYERS = 2
OUTPUT_DIM = 1

# Gate-major column order used inside the kernel: [o, f, i, g]
# (torch stores gates in order i, f, g, o -> indices 3, 1, 0, 2).
_GATE_ORDER = (3, 1, 0, 2)


def lstm_kernel(x_ref, wbig_ref, wrow_ref, brow_ref, wl1_ref, b1_ref,
                wfc_ref, bfc_ref, mask_ref, out_ref):
    H = HIDDEN
    H2 = 2 * H                      # packed [layer0 | layer1] width = 32 lanes
    T = x_ref.shape[0]

    wbig = wbig_ref[...]            # (2H, 8H) gate-major block recurrent weight
    wrow = wrow_ref[...]            # (1, 8H)  [Wih0 | 0], gate-major
    brow = brow_ref[...]            # (1, 8H)  fused biases [b0 | b1], gate-major
    mask = mask_ref[...]            # (1, 2H)  1.0 on layer-0 lanes, 0.0 on layer-1

    # ---- t == 0 (peeled: recurrent LHS is all zeros -> skip the matmul) ----
    g = x_ref[0] * wrow + brow                            # (B, 8H)
    sig = jax.nn.sigmoid(g)
    th = jnp.tanh(g)
    # f*c_old is 0 (zero init); layer-1 half must stay 0 (h2(-1)=c2(-1)=0) -> mask.
    c12 = (sig[:, 2 * H2:3 * H2] * th[:, 3 * H2:4 * H2]) * mask   # (B, 2H)
    h12 = sig[:, 0:H2] * jnp.tanh(c12)                            # [h1(0) | 0]

    # ---- t = 1..T-1: layer0(t) + layer1(t-1) in ONE (B,2H)x(2H,8H) MXU launch ----
    # Gate-major lanes: o=[0:2H), f=[2H:4H), i=[4H:6H), g=[6H:8H).
    # TODO(synk): for very large T, switch the static unroll to
    # lax.fori_loop(..., unroll=4..8) with pl.ds/pl.multiple_of indexing into x.
    for t in range(1, T):
        gall = jnp.dot(h12, wbig, preferred_element_type=jnp.float32)  # (B, 8H)
        g = gall + x_ref[t] * wrow + brow
        sig = jax.nn.sigmoid(g)                 # o/f/i columns used
        th = jnp.tanh(g)                        # g columns used
        c12 = sig[:, H2:2 * H2] * c12 + sig[:, 2 * H2:3 * H2] * th[:, 3 * H2:4 * H2]
        h12 = sig[:, 0:H2] * jnp.tanh(c12)      # directly the next step's LHS

    # ---- epilogue: layer1(T-1) from h1(T-1), h2(T-2); layer-1 weight half only ----
    g1 = jnp.dot(h12, wl1_ref[...], preferred_element_type=jnp.float32) + b1_ref[...]
    sig = jax.nn.sigmoid(g1)                    # (B, 4H): o|f|i|g, each H lanes
    th = jnp.tanh(g1)
    c2 = sig[:, H:2 * H] * c12[:, H:H2] + sig[:, 2 * H:3 * H] * th[:, 3 * H:4 * H]
    h2 = sig[:, 0:H] * jnp.tanh(c2)             # hn[last layer]

    # fc(hn[last]): OUTPUT_DIM == 1 -> lane reduce instead of a K=16 matmul.
    out_ref[...] = (jnp.sum(h2 * wfc_ref[...], axis=-1, keepdims=True)
                    + bfc_ref[...])


def prepare_params(params):
    """One-time repacking of torch-layout LSTM params into the kernel layout."""
    (wih0, whh0, bih0, bhh0, wih1, whh1, bih1, bhh1, wfc, bfc) = params
    H = HIDDEN
    f32 = jnp.float32

    whh0_T = whh0.T.astype(f32)          # (H, 4H)
    wih1_T = wih1.T.astype(f32)          # (H, 4H)
    whh1_T = whh1.T.astype(f32)          # (H, 4H)
    w0 = wih0.reshape(4 * H).astype(f32)            # (4H,) since INPUT_DIM == 1
    b0 = (bih0 + bhh0).astype(f32)
    b1 = (bih1 + bhh1).astype(f32)

    def gate_cols(wT, gi):               # (H, H) columns for torch gate index gi
        return wT[:, gi * H:(gi + 1) * H]

    zeros_hh = jnp.zeros((H, H), f32)
    zeros_h = jnp.zeros((H,), f32)

    # Block recurrent weight, gate-major across layers:
    #   rows 0:H   <- h1(t-1),   rows H:2H <- h2(t-2)
    #   per gate group: [layer0 cols (Whh0^T | 0), layer1 cols (Wih1^T ; Whh1^T)]
    wbig = jnp.concatenate(
        [jnp.concatenate(
            [jnp.concatenate([gate_cols(whh0_T, gi), gate_cols(wih1_T, gi)], axis=1),
             jnp.concatenate([zeros_hh, gate_cols(whh1_T, gi)], axis=1)],
            axis=0)
         for gi in _GATE_ORDER],
        axis=1)                                                      # (2H, 8H)

    # Packed input-projection row [Wih0 | 0] and fused bias row [b0 | b1].
    wrow = jnp.concatenate(
        [jnp.concatenate([w0[gi * H:(gi + 1) * H], zeros_h]) for gi in _GATE_ORDER]
    ).reshape(1, 8 * H)
    brow = jnp.concatenate(
        [jnp.concatenate([b0[gi * H:(gi + 1) * H], b1[gi * H:(gi + 1) * H]])
         for gi in _GATE_ORDER]
    ).reshape(1, 8 * H)

    # Epilogue: layer-1-only weight (2H, 4H) and bias, gate order [o, f, i, g].
    wl1 = jnp.concatenate(
        [jnp.concatenate([gate_cols(wih1_T, gi), gate_cols(whh1_T, gi)], axis=0)
         for gi in _GATE_ORDER],
        axis=1)                                                      # (2H, 4H)
    b1row = jnp.concatenate(
        [b1[gi * H:(gi + 1) * H] for gi in _GATE_ORDER]).reshape(1, 4 * H)

    # Lane mask: 1.0 on layer-0 half of the packed state, 0.0 on layer-1 half.
    mask01 = jnp.concatenate([jnp.ones((H,), f32), zeros_h]).reshape(1, 2 * H)

    wfc_row = wfc.reshape(1, H).astype(f32)
    bfc_r = bfc.reshape(1, 1).astype(f32)

    return (wbig, wrow, brow, wl1, b1row, wfc_row, bfc_r, mask01)


def lstm_forward(x, prep):
    """x: (B, T, INPUT_DIM) float32, batch-first like torch. prep: prepare_params()."""
    wbig, wrow, brow, wl1, b1row, wfc_row, bfc_r, mask01 = prep
    B, T, I = x.shape
    assert I == INPUT_DIM

    x_tm = jnp.transpose(x, (1, 0, 2)).astype(jnp.float32)           # (T, B, 1)

    vmem = pl.BlockSpec(memory_space=pltpu.MemorySpace.VMEM)
    out = pl.pallas_call(
        lstm_kernel,
        out_shape=jax.ShapeDtypeStruct((B, OUTPUT_DIM), jnp.float32),
        in_specs=[vmem] * 9,
        out_specs=vmem,
    )(x_tm, wbig, wrow, brow, wl1, b1row, wfc_row, bfc_r, mask01)
    return out


def ref_forward(x, params):
    """Pure-JAX reference matching torch.nn.LSTM(num_layers=2) + Linear on hn[1]."""
    (wih0, whh0, bih0, bhh0, wih1, whh1, bih1, bhh1, wfc, bfc) = params
    B, T, _ = x.shape
    H = HIDDEN
    P = jax.lax.Precision.HIGHEST
    h1 = jnp.zeros((B, H)); c1 = jnp.zeros((B, H))
    h2 = jnp.zeros((B, H)); c2 = jnp.zeros((B, H))
    for t in range(T):
        xt = x[:, t, :]
        g = (jnp.dot(xt, wih0.T, precision=P) + jnp.dot(h1, whh0.T, precision=P)
             + bih0 + bhh0)
        i, f, gg, o = (jax.nn.sigmoid(g[:, :H]), jax.nn.sigmoid(g[:, H:2 * H]),
                       jnp.tanh(g[:, 2 * H:3 * H]), jax.nn.sigmoid(g[:, 3 * H:]))
        c1 = f * c1 + i * gg
        h1 = o * jnp.tanh(c1)
        g2 = (jnp.dot(h1, wih1.T, precision=P) + jnp.dot(h2, whh1.T, precision=P)
              + bih1 + bhh1)
        i2, f2, gg2, o2 = (jax.nn.sigmoid(g2[:, :H]), jax.nn.sigmoid(g2[:, H:2 * H]),
                           jnp.tanh(g2[:, 2 * H:3 * H]), jax.nn.sigmoid(g2[:, 3 * H:]))
        c2 = f2 * c2 + i2 * gg2
        h2 = o2 * jnp.tanh(c2)
    return jnp.dot(h2, wfc.T, precision=P) + bfc


def init_params(key):
    H = HIDDEN
    k = 1.0 / jnp.sqrt(H)
    keys = jax.random.split(key, 10)
    u = lambda kk, shape: jax.random.uniform(kk, shape, jnp.float32, -k, k)
    wih0 = u(keys[0], (4 * H, INPUT_DIM))
    whh0 = u(keys[1], (4 * H, H))
    bih0 = u(keys[2], (4 * H,))
    bhh0 = u(keys[3], (4 * H,))
    wih1 = u(keys[4], (4 * H, H))
    whh1 = u(keys[5], (4 * H, H))
    bih1 = u(keys[6], (4 * H,))
    bhh1 = u(keys[7], (4 * H,))
    wfc = u(keys[8], (OUTPUT_DIM, H))
    bfc = u(keys[9], (OUTPUT_DIM,))
    return (wih0, whh0, bih0, bhh0, wih1, whh1, bih1, bhh1, wfc, bfc)


if __name__ == "__main__":
    key = jax.random.PRNGKey(0)
    pkey, xkey = jax.random.split(key)
    params = init_params(pkey)
    prep = prepare_params(params)          # one-time weight repacking

    B, T = 2, 8
    x = jax.random.normal(xkey, (B, T, INPUT_DIM), dtype=jnp.float32)

    out = lstm_forward(x, prep)
    out = jax.block_until_ready(out)

    ref = ref_forward(x, params)
    assert out.shape == (B, OUTPUT_DIM)
    assert jnp.allclose(out, ref, atol=1e-2, rtol=1e-2), (out, ref)

    print("KERNEL_OK")
</pallas_src>

<mosaic_0001>
module attributes {stable_mosaic.version = 11 : i64} {
  func.func @lstm_kernel(%arg0: memref<8x2x1xf32, #tpu.memory_space<vmem>>, %arg1: memref<32x128xf32, #tpu.memory_space<vmem>>, %arg2: memref<1x128xf32, #tpu.memory_space<vmem>>, %arg3: memref<1x128xf32, #tpu.memory_space<vmem>>, %arg4: memref<32x64xf32, #tpu.memory_space<vmem>>, %arg5: memref<1x64xf32, #tpu.memory_space<vmem>>, %arg6: memref<1x16xf32, #tpu.memory_space<vmem>>, %arg7: memref<1x1xf32, #tpu.memory_space<vmem>>, %arg8: memref<1x32xf32, #tpu.memory_space<vmem>>, %arg9: memref<2x1xf32, #tpu.memory_space<vmem>>) attributes {dimension_semantics = [], scalar_prefetch = 0 : i64, scratch_operands = 0 : i64, tpu.core_type = #tpu.core_type<tc>} {
    %c0 = arith.constant 0 : index
    %c0_0 = arith.constant 0 : index
    %0 = vector.load %arg1[%c0, %c0_0] : memref<32x128xf32, #tpu.memory_space<vmem>>, vector<32x128xf32>
    %c0_1 = arith.constant 0 : index
    %c0_2 = arith.constant 0 : index
    %1 = vector.load %arg2[%c0_1, %c0_2] : memref<1x128xf32, #tpu.memory_space<vmem>>, vector<1x128xf32>
    %c0_3 = arith.constant 0 : index
    %c0_4 = arith.constant 0 : index
    %2 = vector.load %arg3[%c0_3, %c0_4] : memref<1x128xf32, #tpu.memory_space<vmem>>, vector<1x128xf32>
    %c0_5 = arith.constant 0 : index
    %c0_6 = arith.constant 0 : index
    %3 = vector.load %arg8[%c0_5, %c0_6] : memref<1x32xf32, #tpu.memory_space<vmem>>, vector<1x32xf32>
    %c0_7 = arith.constant 0 : index
    %c0_8 = arith.constant 0 : index
    %c0_9 = arith.constant 0 : index
    %4 = vector.load %arg0[%c0_7, %c0_8, %c0_9] : memref<8x2x1xf32, #tpu.memory_space<vmem>>, vector<1x2x1xf32>
    %5 = vector.shape_cast %4 : vector<1x2x1xf32> to vector<2x1xf32>
    %6 = vector.broadcast %5 : vector<2x1xf32> to vector<2x128xf32>
    %7 = vector.broadcast %1 : vector<1x128xf32> to vector<2x128xf32>
    %8 = arith.mulf %6, %7 : vector<2x128xf32>
    %9 = vector.broadcast %2 : vector<1x128xf32> to vector<2x128xf32>
    %10 = arith.addf %8, %9 : vector<2x128xf32>
    %11 = arith.negf %10 : vector<2x128xf32>
    %12 = math.exp %11 : vector<2x128xf32>
    %cst = arith.constant 1.000000e+00 : f32
    %13 = vector.broadcast %cst : f32 to vector<2x128xf32>
    %14 = arith.addf %13, %12 : vector<2x128xf32>
    %15 = arith.divf %13, %14 : vector<2x128xf32>
    %16 = math.tanh %10 : vector<2x128xf32>
    %17 = vector.extract_strided_slice %15 {offsets = [0, 64], sizes = [2, 32], strides = [1, 1]} : vector<2x128xf32> to vector<2x32xf32>
    %18 = vector.extract_strided_slice %16 {offsets = [0, 96], sizes = [2, 32], strides = [1, 1]} : vector<2x128xf32> to vector<2x32xf32>
    %19 = arith.mulf %17, %18 : vector<2x32xf32>
    %20 = vector.broadcast %3 : vector<1x32xf32> to vector<2x32xf32>
    %21 = arith.mulf %19, %20 : vector<2x32xf32>
    %22 = vector.extract_strided_slice %15 {offsets = [0, 0], sizes = [2, 32], strides = [1, 1]} : vector<2x128xf32> to vector<2x32xf32>
    %23 = math.tanh %21 : vector<2x32xf32>
    %24 = arith.mulf %22, %23 : vector<2x32xf32>
    %cst_10 = arith.constant dense<0.000000e+00> : vector<2x128xf32>
    %25 = tpu.matmul %24, %0, %cst_10 {dimension_numbers = #tpu.dot_dimension_numbers<[1], [0], [0], [1], [0, 0, 1, 1], [], []>} : vector<2x32xf32>, vector<32x128xf32>, vector<2x128xf32> -> vector<2x128xf32>
    %c1 = arith.constant 1 : index
    %c0_11 = arith.constant 0 : index
    %c0_12 = arith.constant 0 : index
    %26 = vector.load %arg0[%c1, %c0_11, %c0_12] : memref<8x2x1xf32, #tpu.memory_space<vmem>>, vector<1x2x1xf32>
    %27 = vector.shape_cast %26 : vector<1x2x1xf32> to vector<2x1xf32>
    %28 = vector.broadcast %27 : vector<2x1xf32> to vector<2x128xf32>
    %29 = vector.broadcast %1 : vector<1x128xf32> to vector<2x128xf32>
    %30 = arith.mulf %28, %29 : vector<2x128xf32>
    %31 = arith.addf %25, %30 : vector<2x128xf32>
    %32 = vector.broadcast %2 : vector<1x128xf32> to vector<2x128xf32>
    %33 = arith.addf %31, %32 : vector<2x128xf32>
    %34 = arith.negf %33 : vector<2x128xf32>
    %35 = math.exp %34 : vector<2x128xf32>
    %cst_13 = arith.constant 1.000000e+00 : f32
    %36 = vector.broadcast %cst_13 : f32 to vector<2x128xf32>
    %37 = arith.addf %36, %35 : vector<2x128xf32>
    %38 = arith.divf %36, %37 : vector<2x128xf32>
    %39 = math.tanh %33 : vector<2x128xf32>
    %40 = vector.extract_strided_slice %38 {offsets = [0, 32], sizes = [2, 32], strides = [1, 1]} : vector<2x128xf32> to vector<2x32xf32>
    %41 = arith.mulf %40, %21 : vector<2x32xf32>
    %42 = vector.extract_strided_slice %38 {offsets = [0, 64], sizes = [2, 32], strides = [1, 1]} : vector<2x128xf32> to vector<2x32xf32>
    %43 = vector.extract_strided_slice %39 {offsets = [0, 96], sizes = [2, 32], strides = [1, 1]} : vector<2x128xf32> to vector<2x32xf32>
    %44 = arith.mulf %42, %43 : vector<2x32xf32>
    %45 = arith.addf %41, %44 : vector<2x32xf32>
    %46 = vector.extract_strided_slice %38 {offsets = [0, 0], sizes = [2, 32], strides = [1, 1]} : vector<2x128xf32> to vector<2x32xf32>
    %47 = math.tanh %45 : vector<2x32xf32>
    %48 = arith.mulf %46, %47 : vector<2x32xf32>
    %cst_14 = arith.constant dense<0.000000e+00> : vector<2x128xf32>
    %49 = tpu.matmul %48, %0, %cst_14 {dimension_numbers = #tpu.dot_dimension_numbers<[1], [0], [0], [1], [0, 0, 1, 1], [], []>} : vector<2x32xf32>, vector<32x128xf32>, vector<2x128xf32> -> vector<2x128xf32>
    %c2 = arith.constant 2 : index
    %c0_15 = arith.constant 0 : index
    %c0_16 = arith.constant 0 : index
    %50 = vector.load %arg0[%c2, %c0_15, %c0_16] : memref<8x2x1xf32, #tpu.memory_space<vmem>>, vector<1x2x1xf32>
    %51 = vector.shape_cast %50 : vector<1x2x1xf32> to vector<2x1xf32>
    %52 = vector.broadcast %51 : vector<2x1xf32> to vector<2x128xf32>
    %53 = vector.broadcast %1 : vector<1x128xf32> to vector<2x128xf32>
    %54 = arith.mulf %52, %53 : vector<2x128xf32>
    %55 = arith.addf %49, %54 : vector<2x128xf32>
    %56 = vector.broadcast %2 : vector<1x128xf32> to vector<2x128xf32>
    %57 = arith.addf %55, %56 : vector<2x128xf32>
    %58 = arith.negf %57 : vector<2x128xf32>
    %59 = math.exp %58 : vector<2x128xf32>
    %cst_17 = arith.constant 1.000000e+00 : f32
    %60 = vector.broadcast %cst_17 : f32 to vector<2x128xf32>
    %61 = arith.addf %60, %59 : vector<2x128xf32>
    %62 = arith.divf %60, %61 : vector<2x128xf32>
    %63 = math.tanh %57 : vector<2x128xf32>
    %64 = vector.extract_strided_slice %62 {offsets = [0, 32], sizes = [2, 32], strides = [1, 1]} : vector<2x128xf32> to vector<2x32xf32>
    %65 = arith.mulf %64, %45 : vector<2x32xf32>
    %66 = vector.extract_strided_slice %62 {offsets = [0, 64], sizes = [2, 32], strides = [1, 1]} : vector<2x128xf32> to vector<2x32xf32>
    %67 = vector.extract_strided_slice %63 {offsets = [0, 96], sizes = [2, 32], strides = [1, 1]} : vector<2x128xf32> to vector<2x32xf32>
    %68 = arith.mulf %66, %67 : vector<2x32xf32>
    %69 = arith.addf %65, %68 : vector<2x32xf32>
    %70 = vector.extract_strided_slice %62 {offsets = [0, 0], sizes = [2, 32], strides = [1, 1]} : vector<2x128xf32> to vector<2x32xf32>
    %71 = math.tanh %69 : vector<2x32xf32>
    %72 = arith.mulf %70, %71 : vector<2x32xf32>
    %cst_18 = arith.constant dense<0.000000e+00> : vector<2x128xf32>
    %73 = tpu.matmul %72, %0, %cst_18 {dimension_numbers = #tpu.dot_dimension_numbers<[1], [0], [0], [1], [0, 0, 1, 1], [], []>} : vector<2x32xf32>, vector<32x128xf32>, vector<2x128xf32> -> vector<2x128xf32>
    %c3 = arith.constant 3 : index
    %c0_19 = arith.constant 0 : index
    %c0_20 = arith.constant 0 : index
    %74 = vector.load %arg0[%c3, %c0_19, %c0_20] : memref<8x2x1xf32, #tpu.memory_space<vmem>>, vector<1x2x1xf32>
    %75 = vector.shape_cast %74 : vector<1x2x1xf32> to vector<2x1xf32>
    %76 = vector.broadcast %75 : vector<2x1xf32> to vector<2x128xf32>
    %77 = vector.broadcast %1 : vector<1x128xf32> to vector<2x128xf32>
    %78 = arith.mulf %76, %77 : vector<2x128xf32>
    %79 = arith.addf %73, %78 : vector<2x128xf32>
    %80 = vector.broadcast %2 : vector<1x128xf32> to vector<2x128xf32>
    %81 = arith.addf %79, %80 : vector<2x128xf32>
    %82 = arith.negf %81 : vector<2x128xf32>
    %83 = math.exp %82 : vector<2x128xf32>
    %cst_21 = arith.constant 1.000000e+00 : f32
    %84 = vector.broadcast %cst_21 : f32 to vector<2x128xf32>
    %85 = arith.addf %84, %83 : vector<2x128xf32>
    %86 = arith.divf %84, %85 : vector<2x128xf32>
    %87 = math.tanh %81 : vector<2x128xf32>
    %88 = vector.extract_strided_slice %86 {offsets = [0, 32], sizes = [2, 32], strides = [1, 1]} : vector<2x128xf32> to vector<2x32xf32>
    %89 = arith.mulf %88, %69 : vector<2x32xf32>
    %90 = vector.extract_strided_slice %86 {offsets = [0, 64], sizes = [2, 32], strides = [1, 1]} : vector<2x128xf32> to vector<2x32xf32>
    %91 = vector.extract_strided_slice %87 {offsets = [0, 96], sizes = [2, 32], strides = [1, 1]} : vector<2x128xf32> to vector<2x32xf32>
    %92 = arith.mulf %90, %91 : vector<2x32xf32>
    %93 = arith.addf %89, %92 : vector<2x32xf32>
    %94 = vector.extract_strided_slice %86 {offsets = [0, 0], sizes = [2, 32], strides = [1, 1]} : vector<2x128xf32> to vector<2x32xf32>
    %95 = math.tanh %93 : vector<2x32xf32>
    %96 = arith.mulf %94, %95 : vector<2x32xf32>
    %cst_22 = arith.constant dense<0.000000e+00> : vector<2x128xf32>
    %97 = tpu.matmul %96, %0, %cst_22 {dimension_numbers = #tpu.dot_dimension_numbers<[1], [0], [0], [1], [0, 0, 1, 1], [], []>} : vector<2x32xf32>, vector<32x128xf32>, vector<2x128xf32> -> vector<2x128xf32>
    %c4 = arith.constant 4 : index
    %c0_23 = arith.constant 0 : index
    %c0_24 = arith.constant 0 : index
    %98 = vector.load %arg0[%c4, %c0_23, %c0_24] : memref<8x2x1xf32, #tpu.memory_space<vmem>>, vector<1x2x1xf32>
    %99 = vector.shape_cast %98 : vector<1x2x1xf32> to vector<2x1xf32>
    %100 = vector.broadcast %99 : vector<2x1xf32> to vector<2x128xf32>
    %101 = vector.broadcast %1 : vector<1x128xf32> to vector<2x128xf32>
    %102 = arith.mulf %100, %101 : vector<2x128xf32>
    %103 = arith.addf %97, %102 : vector<2x128xf32>
    %104 = vector.broadcast %2 : vector<1x128xf32> to vector<2x128xf32>
    %105 = arith.addf %103, %104 : vector<2x128xf32>
    %106 = arith.negf %105 : vector<2x128xf32>
    %107 = math.exp %106 : vector<2x128xf32>
    %cst_25 = arith.constant 1.000000e+00 : f32
    %108 = vector.broadcast %cst_25 : f32 to vector<2x128xf32>
    %109 = arith.addf %108, %107 : vector<2x128xf32>
    %110 = arith.divf %108, %109 : vector<2x128xf32>
    %111 = math.tanh %105 : vector<2x128xf32>
    %112 = vector.extract_strided_slice %110 {offsets = [0, 32], sizes = [2, 32], strides = [1, 1]} : vector<2x128xf32> to vector<2x32xf32>
    %113 = arith.mulf %112, %93 : vector<2x32xf32>
    %114 = vector.extract_strided_slice %110 {offsets = [0, 64], sizes = [2, 32], strides = [1, 1]} : vector<2x128xf32> to vector<2x32xf32>
    %115 = vector.extract_strided_slice %111 {offsets = [0, 96], sizes = [2, 32], strides = [1, 1]} : vector<2x128xf32> to vector<2x32xf32>
    %116 = arith.mulf %114, %115 : vector<2x32xf32>
    %117 = arith.addf %113, %116 : vector<2x32xf32>
    %118 = vector.extract_strided_slice %110 {offsets = [0, 0], sizes = [2, 32], strides = [1, 1]} : vector<2x128xf32> to vector<2x32xf32>
    %119 = math.tanh %117 : vector<2x32xf32>
    %120 = arith.mulf %118, %119 : vector<2x32xf32>
    %cst_26 = arith.constant dense<0.000000e+00> : vector<2x128xf32>
    %121 = tpu.matmul %120, %0, %cst_26 {dimension_numbers = #tpu.dot_dimension_numbers<[1], [0], [0], [1], [0, 0, 1, 1], [], []>} : vector<2x32xf32>, vector<32x128xf32>, vector<2x128xf32> -> vector<2x128xf32>
    %c5 = arith.constant 5 : index
    %c0_27 = arith.constant 0 : index
    %c0_28 = arith.constant 0 : index
    %122 = vector.load %arg0[%c5, %c0_27, %c0_28] : memref<8x2x1xf32, #tpu.memory_space<vmem>>, vector<1x2x1xf32>
    %123 = vector.shape_cast %122 : vector<1x2x1xf32> to vector<2x1xf32>
    %124 = vector.broadcast %123 : vector<2x1xf32> to vector<2x128xf32>
    %125 = vector.broadcast %1 : vector<1x128xf32> to vector<2x128xf32>
    %126 = arith.mulf %124, %125 : vector<2x128xf32>
    %127 = arith.addf %121, %126 : vector<2x128xf32>
    %128 = vector.broadcast %2 : vector<1x128xf32> to vector<2x128xf32>
    %129 = arith.addf %127, %128 : vector<2x128xf32>
    %130 = arith.negf %129 : vector<2x128xf32>
    %131 = math.exp %130 : vector<2x128xf32>
    %cst_29 = arith.constant 1.000000e+00 : f32
    %132 = vector.broadcast %cst_29 : f32 to vector<2x128xf32>
    %133 = arith.addf %132, %131 : vector<2x128xf32>
    %134 = arith.divf %132, %133 : vector<2x128xf32>
    %135 = math.tanh %129 : vector<2x128xf32>
    %136 = vector.extract_strided_slice %134 {offsets = [0, 32], sizes = [2, 32], strides = [1, 1]} : vector<2x128xf32> to vector<2x32xf32>
    %137 = arith.mulf %136, %117 : vector<2x32xf32>
    %138 = vector.extract_strided_slice %134 {offsets = [0, 64], sizes = [2, 32], strides = [1, 1]} : vector<2x128xf32> to vector<2x32xf32>
    %139 = vector.extract_strided_slice %135 {offsets = [0, 96], sizes = [2, 32], strides = [1, 1]} : vector<2x128xf32> to vector<2x32xf32>
    %140 = arith.mulf %138, %139 : vector<2x32xf32>
    %141 = arith.addf %137, %140 : vector<2x32xf32>
    %142 = vector.extract_strided_slice %134 {offsets = [0, 0], sizes = [2, 32], strides = [1, 1]} : vector<2x128xf32> to vector<2x32xf32>
    %143 = math.tanh %141 : vector<2x32xf32>
    %144 = arith.mulf %142, %143 : vector<2x32xf32>
    %cst_30 = arith.constant dense<0.000000e+00> : vector<2x128xf32>
    %145 = tpu.matmul %144, %0, %cst_30 {dimension_numbers = #tpu.dot_dimension_numbers<[1], [0], [0], [1], [0, 0, 1, 1], [], []>} : vector<2x32xf32>, vector<32x128xf32>, vector<2x128xf32> -> vector<2x128xf32>
    %c6 = arith.constant 6 : index
    %c0_31 = arith.constant 0 : index
    %c0_32 = arith.constant 0 : index
    %146 = vector.load %arg0[%c6, %c0_31, %c0_32] : memref<8x2x1xf32, #tpu.memory_space<vmem>>, vector<1x2x1xf32>
    %147 = vector.shape_cast %146 : vector<1x2x1xf32> to vector<2x1xf32>
    %148 = vector.broadcast %147 : vector<2x1xf32> to vector<2x128xf32>
    %149 = vector.broadcast %1 : vector<1x128xf32> to vector<2x128xf32>
    %150 = arith.mulf %148, %149 : vector<2x128xf32>
    %151 = arith.addf %145, %150 : vector<2x128xf32>
    %152 = vector.broadcast %2 : vector<1x128xf32> to vector<2x128xf32>
    %153 = arith.addf %151, %152 : vector<2x128xf32>
    %154 = arith.negf %153 : vector<2x128xf32>
    %155 = math.exp %154 : vector<2x128xf32>
    %cst_33 = arith.constant 1.000000e+00 : f32
    %156 = vector.broadcast %cst_33 : f32 to vector<2x128xf32>
    %157 = arith.addf %156, %155 : vector<2x128xf32>
    %158 = arith.divf %156, %157 : vector<2x128xf32>
    %159 = math.tanh %153 : vector<2x128xf32>
    %160 = vector.extract_strided_slice %158 {offsets = [0, 32], sizes = [2, 32], strides = [1, 1]} : vector<2x128xf32> to vector<2x32xf32>
    %161 = arith.mulf %160, %141 : vector<2x32xf32>
    %162 = vector.extract_strided_slice %158 {offsets = [0, 64], sizes = [2, 32], strides = [1, 1]} : vector<2x128xf32> to vector<2x32xf32>
    %163 = vector.extract_strided_slice %159 {offsets = [0, 96], sizes = [2, 32], strides = [1, 1]} : vector<2x128xf32> to vector<2x32xf32>
    %164 = arith.mulf %162, %163 : vector<2x32xf32>
    %165 = arith.addf %161, %164 : vector<2x32xf32>
    %166 = vector.extract_strided_slice %158 {offsets = [0, 0], sizes = [2, 32], strides = [1, 1]} : vector<2x128xf32> to vector<2x32xf32>
    %167 = math.tanh %165 : vector<2x32xf32>
    %168 = arith.mulf %166, %167 : vector<2x32xf32>
    %cst_34 = arith.constant dense<0.000000e+00> : vector<2x128xf32>
    %169 = tpu.matmul %168, %0, %cst_34 {dimension_numbers = #tpu.dot_dimension_numbers<[1], [0], [0], [1], [0, 0, 1, 1], [], []>} : vector<2x32xf32>, vector<32x128xf32>, vector<2x128xf32> -> vector<2x128xf32>
    %c7 = arith.constant 7 : index
    %c0_35 = arith.constant 0 : index
    %c0_36 = arith.constant 0 : index
    %170 = vector.load %arg0[%c7, %c0_35, %c0_36] : memref<8x2x1xf32, #tpu.memory_space<vmem>>, vector<1x2x1xf32>
    %171 = vector.shape_cast %170 : vector<1x2x1xf32> to vector<2x1xf32>
    %172 = vector.broadcast %171 : vector<2x1xf32> to vector<2x128xf32>
    %173 = vector.broadcast %1 : vector<1x128xf32> to vector<2x128xf32>
    %174 = arith.mulf %172, %173 : vector<2x128xf32>
    %175 = arith.addf %169, %174 : vector<2x128xf32>
    %176 = vector.broadcast %2 : vector<1x128xf32> to vector<2x128xf32>
    %177 = arith.addf %175, %176 : vector<2x128xf32>
    %178 = arith.negf %177 : vector<2x128xf32>
    %179 = math.exp %178 : vector<2x128xf32>
    %cst_37 = arith.constant 1.000000e+00 : f32
    %180 = vector.broadcast %cst_37 : f32 to vector<2x128xf32>
    %181 = arith.addf %180, %179 : vector<2x128xf32>
    %182 = arith.divf %180, %181 : vector<2x128xf32>
    %183 = math.tanh %177 : vector<2x128xf32>
    %184 = vector.extract_strided_slice %182 {offsets = [0, 32], sizes = [2, 32], strides = [1, 1]} : vector<2x128xf32> to vector<2x32xf32>
    %185 = arith.mulf %184, %165 : vector<2x32xf32>
    %186 = vector.extract_strided_slice %182 {offsets = [0, 64], sizes = [2, 32], strides = [1, 1]} : vector<2x128xf32> to vector<2x32xf32>
    %187 = vector.extract_strided_slice %183 {offsets = [0, 96], sizes = [2, 32], strides = [1, 1]} : vector<2x128xf32> to vector<2x32xf32>
    %188 = arith.mulf %186, %187 : vector<2x32xf32>
    %189 = arith.addf %185, %188 : vector<2x32xf32>
    %190 = vector.extract_strided_slice %182 {offsets = [0, 0], sizes = [2, 32], strides = [1, 1]} : vector<2x128xf32> to vector<2x32xf32>
    %191 = math.tanh %189 : vector<2x32xf32>
    %192 = arith.mulf %190, %191 : vector<2x32xf32>
    %c0_38 = arith.constant 0 : index
    %c0_39 = arith.constant 0 : index
    %193 = vector.load %arg4[%c0_38, %c0_39] : memref<32x64xf32, #tpu.memory_space<vmem>>, vector<32x64xf32>
    %cst_40 = arith.constant dense<0.000000e+00> : vector<2x64xf32>
    %194 = tpu.matmul %192, %193, %cst_40 {dimension_numbers = #tpu.dot_dimension_numbers<[1], [0], [0], [1], [0, 0, 1, 1], [], []>} : vector<2x32xf32>, vector<32x64xf32>, vector<2x64xf32> -> vector<2x64xf32>
    %c0_41 = arith.constant 0 : index
    %c0_42 = arith.constant 0 : index
    %195 = vector.load %arg5[%c0_41, %c0_42] : memref<1x64xf32, #tpu.memory_space<vmem>>, vector<1x64xf32>
    %196 = vector.broadcast %195 : vector<1x64xf32> to vector<2x64xf32>
    %197 = arith.addf %194, %196 : vector<2x64xf32>
    %198 = arith.negf %197 : vector<2x64xf32>
    %199 = math.exp %198 : vector<2x64xf32>
    %cst_43 = arith.constant 1.000000e+00 : f32
    %200 = vector.broadcast %cst_43 : f32 to vector<2x64xf32>
    %201 = arith.addf %200, %199 : vector<2x64xf32>
    %202 = arith.divf %200, %201 : vector<2x64xf32>
    %203 = math.tanh %197 : vector<2x64xf32>
    %204 = vector.extract_strided_slice %202 {offsets = [0, 16], sizes = [2, 16], strides = [1, 1]} : vector<2x64xf32> to vector<2x16xf32>
    %205 = vector.extract_strided_slice %189 {offsets = [0, 16], sizes = [2, 16], strides = [1, 1]} : vector<2x32xf32> to vector<2x16xf32>
    %206 = arith.mulf %204, %205 : vector<2x16xf32>
    %207 = vector.extract_strided_slice %202 {offsets = [0, 32], sizes = [2, 16], strides = [1, 1]} : vector<2x64xf32> to vector<2x16xf32>
    %208 = vector.extract_strided_slice %203 {offsets = [0, 48], sizes = [2, 16], strides = [1, 1]} : vector<2x64xf32> to vector<2x16xf32>
    %209 = arith.mulf %207, %208 : vector<2x16xf32>
    %210 = arith.addf %206, %209 : vector<2x16xf32>
    %211 = vector.extract_strided_slice %202 {offsets = [0, 0], sizes = [2, 16], strides = [1, 1]} : vector<2x64xf32> to vector<2x16xf32>
    %212 = math.tanh %210 : vector<2x16xf32>
    %213 = arith.mulf %211, %212 : vector<2x16xf32>
    %c0_44 = arith.constant 0 : index
    %c0_45 = arith.constant 0 : index
    %214 = vector.load %arg6[%c0_44, %c0_45] : memref<1x16xf32, #tpu.memory_space<vmem>>, vector<1x16xf32>
    %215 = vector.broadcast %214 : vector<1x16xf32> to vector<2x16xf32>
    %216 = arith.mulf %213, %215 : vector<2x16xf32>
    %cst_46 = arith.constant dense<0.000000e+00> : vector<2xf32>
    %217 = vector.multi_reduction <add>, %216, %cst_46 [1] : vector<2x16xf32> to vector<2xf32>
    %218 = vector.shape_cast %217 : vector<2xf32> to vector<2x1xf32>
    %c0_47 = arith.constant 0 : index
    %c0_48 = arith.constant 0 : index
    %219 = vector.load %arg7[%c0_47, %c0_48] : memref<1x1xf32, #tpu.memory_space<vmem>>, vector<1x1xf32>
    %220 = vector.broadcast %219 : vector<1x1xf32> to vector<2x1xf32>
    %221 = arith.addf %218, %220 : vector<2x1xf32>
    %c0_49 = arith.constant 0 : index
    %c0_50 = arith.constant 0 : index
    %222 = vector.load %arg9[%c0_49, %c0_50] : memref<2x1xf32, #tpu.memory_space<vmem>>, vector<2x1xf32>
    tpu.vector_store %arg9[%c0_49, %c0_50], %221 {strides = array<i32>} : memref<2x1xf32, #tpu.memory_space<vmem>>, vector<2x1xf32>,
    return
  }
}

</mosaic_0001>

<llo_original>
// kernel: tpu_custom_call.1
$region0: #{tpu_custom_call.1}
  #allocation0 [shape = 'u32[]', space=smem, size = 0x4, offset = 0x4, fixed_abs, tag = 'smem constant byte address 0x4 - core index']
  #allocation1 [shape = 'u32[72,128]{1,0:T(1,128)}', space=vmem, size = 0x9000, scoped, tag = 'internal scratch']
  #allocation2 [shape = 'f32[1,1]{1,0:T(1,128)S(1)}', space=vmem, size = 0x200, scoped, tag = 'scoped memory for tpu_custom_call.1']
  %s0 = inlined_call_operand.vmem [shape: f32[8,2,1], index: 0, kind: input, shape index: {}]
  %s1 = inlined_call_operand.hbm [shape: f32[32,128], index: 1, kind: input, shape index: {}]
  %s2 = inlined_call_operand.vmem [shape: f32[1,128], index: 2, kind: input, shape index: {}]
  %s3 = inlined_call_operand.vmem [shape: f32[1,128], index: 3, kind: input, shape index: {}]
  %s4 = inlined_call_operand.hbm [shape: f32[32,64], index: 4, kind: input, shape index: {}]
  %s5 = inlined_call_operand.vmem [shape: f32[1,64], index: 5, kind: input, shape index: {}]
  %s6 = inlined_call_operand.vmem [shape: f32[1,16], index: 6, kind: input, shape index: {}]
  %s7 = inlined_call_operand.<no memory space> [shape: f32[1,1], index: 7, kind: input, shape index: {}]
  %s8 = inlined_call_operand.vmem [shape: f32[1,32], index: 8, kind: input, shape index: {}]
  %s9 = inlined_call_operand.vmem [shape: f32[2,1], index: 9, kind: output, shape index: {}]
  %s10 = sld [smem:[#allocation0]]
  $region54: #{tpu_custom_call.1} parent=0
    _
  %s12 = ssub.s32 1, %s10
  %s13 = scalar_select 0, %s12, %s10
  %v14 = vstv %s7
  %15 = vst [vmem:[#allocation2] sm:$0x1] %v14
  $region1: #{tpu_custom_call.1} parent=0
    #allocation3 [shape = 'u8[16384]{0}', space=vmem, size = 0x4000, scoped, tag = 'input window, operand 1, single buffered']
    #allocation4 [shape = 's32[1]{0}', space=sflag, size = 0x4, scoped, tag = 'scoped memory for tpu_custom_call.1']
    #allocation5 [shape = 'u8[16384]{0}', space=vmem, size = 0x4000, scoped, tag = 'input window, operand 4, single buffered']
    #allocation6 [shape = 's32[1]{0}', space=sflag, size = 0x4, scoped, tag = 'scoped memory for tpu_custom_call.1']
    %16 = vsyncpa [#allocation4], 0
    %17 = vsyncpa [#allocation6], 0
    // Predicated region
    $region2: #{tpu_custom_call.1} parent=1 // pred_check
      _
    $region3: #{tpu_custom_call.1} parent=1 // pred_check_branch
      %19 = sbr.rel (0) target = $region5
    $region4: #{tpu_custom_call.1} parent=1 // pred_region
      _
    $region5: #{tpu_custom_call.1} parent=1 // pred_fallthru
      _
    // Predicated region
    $region6: #{tpu_custom_call.1} parent=1 // pred_check
      _
    $region7: #{tpu_custom_call.1} parent=1 // pred_check_branch
      %21 = sbr.rel (0) target = $region9
    $region8: #{tpu_custom_call.1} parent=1 // pred_region
      %23 = vsyncadd [#allocation4], 0
      %s24 = sshll.u32 %s1, 4
      %s25 = int_to_ptr.hbm [resolvable:$true] %s24
      %s26 = sshll.u32 [#allocation3], 4
      %s27 = int_to_ptr.vmem [resolvable:$true] %s26
      %32 = dma.hbm_to_vmem [thread:$0]  %s25, 512, %s27, [#allocation4], 128, 128, 8
    $region9: #{tpu_custom_call.1} parent=1 // pred_fallthru
      _
    // Predicated region
    $region10: #{tpu_custom_call.1} parent=1 // pred_check
      _
    $region11: #{tpu_custom_call.1} parent=1 // pred_check_branch
      %34 = sbr.rel (0) target = $region13
    $region12: #{tpu_custom_call.1} parent=1 // pred_region
      _
    $region13: #{tpu_custom_call.1} parent=1 // pred_fallthru
      _
    // Predicated region
    $region14: #{tpu_custom_call.1} parent=1 // pred_check
      _
    $region15: #{tpu_custom_call.1} parent=1 // pred_check_branch
      %36 = sbr.rel (0) target = $region17
    $region16: #{tpu_custom_call.1} parent=1 // pred_region
      _
    $region17: #{tpu_custom_call.1} parent=1 // pred_fallthru
      _
    // Predicated region
    $region18: #{tpu_custom_call.1} parent=1 // pred_check
      _
    $region19: #{tpu_custom_call.1} parent=1 // pred_check_branch
      %38 = sbr.rel (0) target = $region21
    $region20: #{tpu_custom_call.1} parent=1 // pred_region
      %40 = vsyncadd [#allocation6], 0
      %s41 = sshll.u32 %s4, 4
      %s42 = int_to_ptr.hbm [resolvable:$true] %s41
      %s43 = sshll.u32 [#allocation5], 4
      %s44 = int_to_ptr.vmem [resolvable:$true] %s43
      %49 = dma.hbm_to_vmem [thread:$0]  %s42, 512, %s44, [#allocation6], 128, 128, 8
    $region21: #{tpu_custom_call.1} parent=1 // pred_fallthru
      _
    // Predicated region
    $region22: #{tpu_custom_call.1} parent=1 // pred_check
      _
    $region23: #{tpu_custom_call.1} parent=1 // pred_check_branch
      %51 = sbr.rel (0) target = $region25
    $region24: #{tpu_custom_call.1} parent=1 // pred_region
      _
    $region25: #{tpu_custom_call.1} parent=1 // pred_fallthru
      _
    // Predicated region
    $region26: #{tpu_custom_call.1} parent=1 // pred_check
      _
    $region27: #{tpu_custom_call.1} parent=1 // pred_check_branch
      %53 = sbr.rel (0) target = $region29
    $region28: #{tpu_custom_call.1} parent=1 // pred_region
      _
    $region29: #{tpu_custom_call.1} parent=1 // pred_fallthru
      _
    // Predicated region
    $region30: #{tpu_custom_call.1} parent=1 // pred_check
      _
    $region31: #{tpu_custom_call.1} parent=1 // pred_check_branch
      %55 = sbr.rel (0) target = $region33
    $region32: #{tpu_custom_call.1} parent=1 // pred_region
      _
    $region33: #{tpu_custom_call.1} parent=1 // pred_fallthru
      _
    // Predicated region
    $region34: #{tpu_custom_call.1} parent=1 // pred_check
      _
    $region35: #{tpu_custom_call.1} parent=1 // pred_check_branch
      %57 = sbr.rel (0) target = $region37
    $region36: #{tpu_custom_call.1} parent=1 // pred_region
      _
    $region37: #{tpu_custom_call.1} parent=1 // pred_fallthru
      _
    // Predicated region
    $region38: #{tpu_custom_call.1} parent=1 // pred_check
      _
    $region39: #{tpu_custom_call.1} parent=1 // pred_check_branch
      %59 = sbr.rel (0) target = $region41
    $region40: #{tpu_custom_call.1} parent=1 // pred_region
      %61 = dma.done [#allocation4], 512
    $region41: #{tpu_custom_call.1} parent=1 // pred_fallthru
      _
    // Predicated region
    $region42: #{tpu_custom_call.1} parent=1 // pred_check
      _
    $region43: #{tpu_custom_call.1} parent=1 // pred_check_branch
      %63 = sbr.rel (0) target = $region45
    $region44: #{tpu_custom_call.1} parent=1 // pred_region
      %65 = dma.done [#allocation6], 512
    $region45: #{tpu_custom_call.1} parent=1 // pred_fallthru
      _
    %v66 = vld [vmem:[#allocation3] sm:$0xff]
    %v67 = vld [vmem:[#allocation3 + $0x8] sm:$0xff]
    %v68 = vld [vmem:[#allocation3 + $0x10] sm:$0xff]
    %v69 = vld [vmem:[#allocation3 + $0x18] sm:$0xff]
    %v70 = vld [vmem:[%s2] sm:$0x1]
    %v71 = vld [vmem:[%s3] sm:$0x1]
    %v72 = vld [vmem:[%s8] sm:$0x1]
    %v73 = vld [vmem:[%s0] sm:$0x3]
    %75 = vset.pattern.permute.xlu0 0
    %76 = vperm.xlu0 %75, %v73
    %v77 = vpop.permute.xlu0 %76
    %v80 = vperm.slane %v70, 0
    %v82 = vmul.f32 %v77, %v80
    %v84 = vperm.slane %v71, 0
    %v86 = vadd.f32 %v82, %v84
    %v87 = vxor.u32 %v86, 2147483648
    %v88 = vmul.f32 %v87, 1.442695
    %v89 = vpow.pop %v88
    %v90 = vadd.f32 %v89, 1.0
    %v91 = vrcp.pop %v90
    %v92 = vmul.f32 %v90, %v91
    %v93 = vsub.f32 1.0, %v92
    %v94 = vmul.f32 %v91, %v93
    %v95 = vadd.f32 %v91, %v94
    %vm96 = vweird.f32 %v90
    %vm97 = vweird.f32 %v91
    %vm98 = vmor %vm96, %vm97
    %v99 = vsel %vm98, %v91, %v95
    %v100 = vand.u32 2147483647, %v90
    %vm101 = vcmp.eq.f32.partialorder %v100, 8.507059e+37
    %v102 = vand.u32 %v90, 2147483648
    %v103 = vor.u32 1.1754944e-38, %v102
    %v104 = vsel %vm101, %v103, %v99
    %v105 = vmul.f32 1.0, %v104
    %v106 = vtanh.pop %v86
    %108 = vrot.lane.b32.xlu0 %v106, 96
    %v109 = vpop.permute.xlu0 %108
    %v111 = vmul.f32 %v105, %v109
    %v113 = vperm.slane %v72, 0
    %114 = vrot.lane.b32.xlu0 %v113, 64
    %v115 = vpop.permute.xlu0 %114
    %v117 = vmul.f32 %v111, %v115
    %v118 = vtanh.pop %v117
    %120 = vrot.lane.b32.xlu0 %v118, 64
    %v121 = vpop.permute.xlu0 %120
    %v123 = vmul.f32 %v105, %v121
    %s124 = scalar_lea.vmem %s0, 2
    %v125 = vld [vmem:[%s124] sm:$0x3]
    %127 = vset.pattern.permute.xlu0 0
    %128 = vperm.xlu0 %127, %v125
    %v129 = vpop.permute.xlu0 %128
    %v131 = vmul.f32 %v129, %v80
    %vm132 = vcmask 261120
    %v134 = vsel %vm132, %v123, 0
    %136 = vmatpush.msra.mxu0 0.0
    %137 = vmatpush.msra.mxu0 0.0
    %138 = vmatpush.msra.mxu0 0.0
    %139 = vmatpush.msra.mxu0 0.0
    %140 = vmatpush.msra.mxu0 0.0
    %141 = vmatpush.msra.mxu0 0.0
    %142 = vmatpush.msra.mxu0 0.0
    %143 = vmatpush.msra.mxu0 0.0
    %144 = vmatpush.msra.mxu0 0.0
    %145 = vmatpush.msra.mxu0 0.0
    %146 = vmatpush.msra.mxu0 0.0
    %147 = vmatpush.msra.mxu0 0.0
    %148 = vmatpush.msra.mxu0 %v69
    %149 = vmatpush.msra.mxu0 %v68
    %150 = vmatpush.msra.mxu0 %v67
    %151 = vmatpush.msra.mxu0 %v66
    %152 = vmatmul.f32.gmra.mxu0 %v134
    %v153 = vpop.f32.mrf.mxu0
    %v154 = vadd.f32 %v131, %v153
    %155 = vdwg.mxu0
    %v156 = vadd.f32 %v154, %v84
    %v157 = vxor.u32 %v156, 2147483648
    %v158 = vmul.f32 %v157, 1.442695
    %v159 = vpow.pop %v158
    %v160 = vadd.f32 %v159, 1.0
    %v161 = vrcp.pop %v160
    %v162 = vmul.f32 %v160, %v161
    %v163 = vsub.f32 1.0, %v162
    %v164 = vmul.f32 %v161, %v163
    %v165 = vadd.f32 %v161, %v164
    %vm166 = vweird.f32 %v160
    %vm167 = vweird.f32 %v161
    %vm168 = vmor %vm166, %vm167
    %v169 = vsel %vm168, %v161, %v165
    %v170 = vand.u32 2147483647, %v160
    %vm171 = vcmp.eq.f32.partialorder %v170, 8.507059e+37
    %v172 = vand.u32 %v160, 2147483648
    %v173 = vor.u32 1.1754944e-38, %v172
    %v174 = vsel %vm171, %v173, %v169
    %v175 = vmul.f32 1.0, %v174
    %v176 = vtanh.pop %v156
    %178 = vrot.lane.b32.xlu0 %v117, 96
    %v179 = vpop.permute.xlu0 %178
    %v181 = vmul.f32 %v175, %v179
    %183 = vrot.lane.b32.xlu0 %v176, 96
    %v184 = vpop.permute.xlu0 %183
    %v186 = vmul.f32 %v175, %v184
    %188 = vrot.lane.b32.xlu0 %v186, 96
    %v189 = vpop.permute.xlu0 %188
    %v191 = vadd.f32 %v181, %v189
    %v192 = vtanh.pop %v191
    %194 = vrot.lane.b32.xlu0 %v192, 96
    %v195 = vpop.permute.xlu0 %194
    %v197 = vmul.f32 %v175, %v195
    %s198 = scalar_lea.vmem %s0, 4
    %v199 = vld [vmem:[%s198] sm:$0x3]
    %201 = vset.pattern.permute.xlu0 0
    %202 = vperm.xlu0 %201, %v199
    %v203 = vpop.permute.xlu0 %202
    %v205 = vmul.f32 %v203, %v80
    %v207 = vsel %vm132, %v197, 0
    %209 = vmatpush.msra.mxu0 0.0
    %210 = vmatpush.msra.mxu0 0.0
    %211 = vmatpush.msra.mxu0 0.0
    %212 = vmatpush.msra.mxu0 0.0
    %213 = vmatpush.msra.mxu0 0.0
    %214 = vmatpush.msra.mxu0 0.0
    %215 = vmatpush.msra.mxu0 0.0
    %216 = vmatpush.msra.mxu0 0.0
    %217 = vmatpush.msra.mxu0 0.0
    %218 = vmatpush.msra.mxu0 0.0
    %219 = vmatpush.msra.mxu0 0.0
    %220 = vmatpush.msra.mxu0 0.0
    %221 = vmatpush.msra.mxu0 %v69
    %222 = vmatpush.msra.mxu0 %v68
    %223 = vmatpush.msra.mxu0 %v67
    %224 = vmatpush.msra.mxu0 %v66
    %225 = vmatmul.f32.gmra.mxu0 %v207
    %v226 = vpop.f32.mrf.mxu0
    %v227 = vadd.f32 %v205, %v226
    %228 = vdwg.mxu0
    %v229 = vadd.f32 %v227, %v84
    %v230 = vxor.u32 %v229, 2147483648
    %v231 = vmul.f32 %v230, 1.442695
    %v232 = vpow.pop %v231
    %v233 = vadd.f32 %v232, 1.0
    %v234 = vrcp.pop %v233
    %v235 = vmul.f32 %v233, %v234
    %v236 = vsub.f32 1.0, %v235
    %v237 = vmul.f32 %v234, %v236
    %v238 = vadd.f32 %v234, %v237
    %vm239 = vweird.f32 %v233
    %vm240 = vweird.f32 %v234
    %vm241 = vmor %vm239, %vm240
    %v242 = vsel %vm241, %v234, %v238
    %v243 = vand.u32 2147483647, %v233
    %vm244 = vcmp.eq.f32.partialorder %v243, 8.507059e+37
    %v245 = vand.u32 %v233, 2147483648
    %v246 = vor.u32 1.1754944e-38, %v245
    %v247 = vsel %vm244, %v246, %v242
    %v248 = vmul.f32 1.0, %v247
    %v249 = vtanh.pop %v229
    %v250 = vmul.f32 %v248, %v191
    %252 = vrot.lane.b32.xlu0 %v249, 96
    %v253 = vpop.permute.xlu0 %252
    %v255 = vmul.f32 %v248, %v253
    %257 = vrot.lane.b32.xlu0 %v255, 96
    %v258 = vpop.permute.xlu0 %257
    %v260 = vadd.f32 %v250, %v258
    %v261 = vtanh.pop %v260
    %263 = vrot.lane.b32.xlu0 %v261, 96
    %v264 = vpop.permute.xlu0 %263
    %v266 = vmul.f32 %v248, %v264
    %s267 = scalar_lea.vmem %s0, 6
    %v268 = vld [vmem:[%s267] sm:$0x3]
    %270 = vset.pattern.permute.xlu0 0
    %271 = vperm.xlu0 %270, %v268
    %v272 = vpop.permute.xlu0 %271
    %v274 = vmul.f32 %v272, %v80
    %v276 = vsel %vm132, %v266, 0
    %278 = vmatpush.msra.mxu0 0.0
    %279 = vmatpush.msra.mxu0 0.0
    %280 = vmatpush.msra.mxu0 0.0
    %281 = vmatpush.msra.mxu0 0.0
    %282 = vmatpush.msra.mxu0 0.0
    %283 = vmatpush.msra.mxu0 0.0
    %284 = vmatpush.msra.mxu0 0.0
    %285 = vmatpush.msra.mxu0 0.0
    %286 = vmatpush.msra.mxu0 0.0
    %287 = vmatpush.msra.mxu0 0.0
    %288 = vmatpush.msra.mxu0 0.0
    %289 = vmatpush.msra.mxu0 0.0
    %290 = vmatpush.msra.mxu0 %v69
    %291 = vmatpush.msra.mxu0 %v68
    %292 = vmatpush.msra.mxu0 %v67
    %293 = vmatpush.msra.mxu0 %v66
    %294 = vmatmul.f32.gmra.mxu0 %v276
    %v295 = vpop.f32.mrf.mxu0
    %v296 = vadd.f32 %v274, %v295
    %297 = vdwg.mxu0
    %v298 = vadd.f32 %v296, %v84
    %v299 = vxor.u32 %v298, 2147483648
    %v300 = vmul.f32 %v299, 1.442695
    %v301 = vpow.pop %v300
    %v302 = vadd.f32 %v301, 1.0
    %v303 = vrcp.pop %v302
    %v304 = vmul.f32 %v302, %v303
    %v305 = vsub.f32 1.0, %v304
    %v306 = vmul.f32 %v303, %v305
    %v307 = vadd.f32 %v303, %v306
    %vm308 = vweird.f32 %v302
    %vm309 = vweird.f32 %v303
    %vm310 = vmor %vm308, %vm309
    %v311 = vsel %vm310, %v303, %v307
    %v312 = vand.u32 2147483647, %v302
    %vm313 = vcmp.eq.f32.partialorder %v312, 8.507059e+37
    %v314 = vand.u32 %v302, 2147483648
    %v315 = vor.u32 1.1754944e-38, %v314
    %v316 = vsel %vm313, %v315, %v311
    %v317 = vmul.f32 1.0, %v316
    %v318 = vtanh.pop %v298
    %v319 = vmul.f32 %v317, %v260
    %321 = vrot.lane.b32.xlu0 %v318, 96
    %v322 = vpop.permute.xlu0 %321
    %v324 = vmul.f32 %v317, %v322
    %326 = vrot.lane.b32.xlu0 %v324, 96
    %v327 = vpop.permute.xlu0 %326
    %v329 = vadd.f32 %v319, %v327
    %v330 = vtanh.pop %v329
    %332 = vrot.lane.b32.xlu0 %v330, 96
    %v333 = vpop.permute.xlu0 %332
    %v335 = vmul.f32 %v317, %v333
    %s336 = scalar_lea.vmem %s0, 8
    %v337 = vld [vmem:[%s336] sm:$0x3]
    %339 = vset.pattern.permute.xlu0 0
    %340 = vperm.xlu0 %339, %v337
    %v341 = vpop.permute.xlu0 %340
    %v343 = vmul.f32 %v341, %v80
    %v345 = vsel %vm132, %v335, 0
    %347 = vmatpush.msra.mxu0 0.0
    %348 = vmatpush.msra.mxu0 0.0
    %349 = vmatpush.msra.mxu0 0.0
    %350 = vmatpush.msra.mxu0 0.0
    %351 = vmatpush.msra.mxu0 0.0
    %352 = vmatpush.msra.mxu0 0.0
    %353 = vmatpush.msra.mxu0 0.0
    %354 = vmatpush.msra.mxu0 0.0
    %355 = vmatpush.msra.mxu0 0.0
    %356 = vmatpush.msra.mxu0 0.0
    %357 = vmatpush.msra.mxu0 0.0
    %358 = vmatpush.msra.mxu0 0.0
    %359 = vmatpush.msra.mxu0 %v69
    %360 = vmatpush.msra.mxu0 %v68
    %361 = vmatpush.msra.mxu0 %v67
    %362 = vmatpush.msra.mxu0 %v66
    %363 = vmatmul.f32.gmra.mxu0 %v345
    %v364 = vpop.f32.mrf.mxu0
    %v365 = vadd.f32 %v343, %v364
    %366 = vdwg.mxu0
    %v367 = vadd.f32 %v365, %v84
    %v368 = vxor.u32 %v367, 2147483648
    %v369 = vmul.f32 %v368, 1.442695
    %v370 = vpow.pop %v369
    %v371 = vadd.f32 %v370, 1.0
    %v372 = vrcp.pop %v371
    %v373 = vmul.f32 %v371, %v372
    %v374 = vsub.f32 1.0, %v373
    %v375 = vmul.f32 %v372, %v374
    %v376 = vadd.f32 %v372, %v375
    %vm377 = vweird.f32 %v371
    %vm378 = vweird.f32 %v372
    %vm379 = vmor %vm377, %vm378
    %v380 = vsel %vm379, %v372, %v376
    %v381 = vand.u32 2147483647, %v371
    %vm382 = vcmp.eq.f32.partialorder %v381, 8.507059e+37
    %v383 = vand.u32 %v371, 2147483648
    %v384 = vor.u32 1.1754944e-38, %v383
    %v385 = vsel %vm382, %v384, %v380
    %v386 = vmul.f32 1.0, %v385
    %v387 = vtanh.pop %v367
    %v388 = vmul.f32 %v386, %v329
    %390 = vrot.lane.b32.xlu0 %v387, 96
    %v391 = vpop.permute.xlu0 %390
    %v393 = vmul.f32 %v386, %v391
    %395 = vrot.lane.b32.xlu0 %v393, 96
    %v396 = vpop.permute.xlu0 %395
    %v398 = vadd.f32 %v388, %v396
    %v399 = vtanh.pop %v398
    %401 = vrot.lane.b32.xlu0 %v399, 96
    %v402 = vpop.permute.xlu0 %401
    %v404 = vmul.f32 %v386, %v402
    %s405 = scalar_lea.vmem %s0, 10
    %v406 = vld [vmem:[%s405] sm:$0x3]
    %408 = vset.pattern.permute.xlu0 0
    %409 = vperm.xlu0 %408, %v406
    %v410 = vpop.permute.xlu0 %409
    %v412 = vmul.f32 %v410, %v80
    %v414 = vsel %vm132, %v404, 0
    %416 = vmatpush.msra.mxu0 0.0
    %417 = vmatpush.msra.mxu0 0.0
    %418 = vmatpush.msra.mxu0 0.0
    %419 = vmatpush.msra.mxu0 0.0
    %420 = vmatpush.msra.mxu0 0.0
    %421 = vmatpush.msra.mxu0 0.0
    %422 = vmatpush.msra.mxu0 0.0
    %423 = vmatpush.msra.mxu0 0.0
    %424 = vmatpush.msra.mxu0 0.0
    %425 = vmatpush.msra.mxu0 0.0
    %426 = vmatpush.msra.mxu0 0.0
    %427 = vmatpush.msra.mxu0 0.0
    %428 = vmatpush.msra.mxu0 %v69
    %429 = vmatpush.msra.mxu0 %v68
    %430 = vmatpush.msra.mxu0 %v67
    %431 = vmatpush.msra.mxu0 %v66
    %432 = vmatmul.f32.gmra.mxu0 %v414
    %v433 = vpop.f32.mrf.mxu0
    %v434 = vadd.f32 %v412, %v433
    %435 = vdwg.mxu0
    %v436 = vadd.f32 %v434, %v84
    %v437 = vxor.u32 %v436, 2147483648
    %v438 = vmul.f32 %v437, 1.442695
    %v439 = vpow.pop %v438
    %v440 = vadd.f32 %v439, 1.0
    %v441 = vrcp.pop %v440
    %v442 = vmul.f32 %v440, %v441
    %v443 = vsub.f32 1.0, %v442
    %v444 = vmul.f32 %v441, %v443
    %v445 = vadd.f32 %v441, %v444
    %vm446 = vweird.f32 %v440
    %vm447 = vweird.f32 %v441
    %vm448 = vmor %vm446, %vm447
    %v449 = vsel %vm448, %v441, %v445
    %v450 = vand.u32 2147483647, %v440
    %vm451 = vcmp.eq.f32.partialorder %v450, 8.507059e+37
    %v452 = vand.u32 %v440, 2147483648
    %v453 = vor.u32 1.1754944e-38, %v452
    %v454 = vsel %vm451, %v453, %v449
    %v455 = vmul.f32 1.0, %v454
    %v456 = vtanh.pop %v436
    %v457 = vmul.f32 %v455, %v398
    %459 = vrot.lane.b32.xlu0 %v456, 96
    %v460 = vpop.permute.xlu0 %459
    %v462 = vmul.f32 %v455, %v460
    %464 = vrot.lane.b32.xlu0 %v462, 96
    %v465 = vpop.permute.xlu0 %464
    %v467 = vadd.f32 %v457, %v465
    %v468 = vtanh.pop %v467
    %470 = vrot.lane.b32.xlu0 %v468, 96
    %v471 = vpop.permute.xlu0 %470
    %v473 = vmul.f32 %v455, %v471
    %s474 = scalar_lea.vmem %s0, 12
    %v475 = vld [vmem:[%s474] sm:$0x3]
    %477 = vset.pattern.permute.xlu0 0
    %478 = vperm.xlu0 %477, %v475
    %v479 = vpop.permute.xlu0 %478
    %v481 = vmul.f32 %v479, %v80
    %v483 = vsel %vm132, %v473, 0
    %485 = vmatpush.msra.mxu0 0.0
    %486 = vmatpush.msra.mxu0 0.0
    %487 = vmatpush.msra.mxu0 0.0
    %488 = vmatpush.msra.mxu0 0.0
    %489 = vmatpush.msra.mxu0 0.0
    %490 = vmatpush.msra.mxu0 0.0
    %491 = vmatpush.msra.mxu0 0.0
    %492 = vmatpush.msra.mxu0 0.0
    %493 = vmatpush.msra.mxu0 0.0
    %494 = vmatpush.msra.mxu0 0.0
    %495 = vmatpush.msra.mxu0 0.0
    %496 = vmatpush.msra.mxu0 0.0
    %497 = vmatpush.msra.mxu0 %v69
    %498 = vmatpush.msra.mxu0 %v68
    %499 = vmatpush.msra.mxu0 %v67
    %500 = vmatpush.msra.mxu0 %v66
    %501 = vmatmul.f32.gmra.mxu0 %v483
    %v502 = vpop.f32.mrf.mxu0
    %v503 = vadd.f32 %v481, %v502
    %504 = vdwg.mxu0
    %v505 = vadd.f32 %v503, %v84
    %v506 = vxor.u32 %v505, 2147483648
    %v507 = vmul.f32 %v506, 1.442695
    %v508 = vpow.pop %v507
    %v509 = vadd.f32 %v508, 1.0
    %v510 = vrcp.pop %v509
    %v511 = vmul.f32 %v509, %v510
    %v512 = vsub.f32 1.0, %v511
    %v513 = vmul.f32 %v510, %v512
    %v514 = vadd.f32 %v510, %v513
    %vm515 = vweird.f32 %v509
    %vm516 = vweird.f32 %v510
    %vm517 = vmor %vm515, %vm516
    %v518 = vsel %vm517, %v510, %v514
    %v519 = vand.u32 2147483647, %v509
    %vm520 = vcmp.eq.f32.partialorder %v519, 8.507059e+37
    %v521 = vand.u32 %v509, 2147483648
    %v522 = vor.u32 1.1754944e-38, %v521
    %v523 = vsel %vm520, %v522, %v518
    %v524 = vmul.f32 1.0, %v523
    %v525 = vtanh.pop %v505
    %v526 = vmul.f32 %v524, %v467
    %528 = vrot.lane.b32.xlu0 %v525, 96
    %v529 = vpop.permute.xlu0 %528
    %v531 = vmul.f32 %v524, %v529
    %533 = vrot.lane.b32.xlu0 %v531, 96
    %v534 = vpop.permute.xlu0 %533
    %v536 = vadd.f32 %v526, %v534
    %v537 = vtanh.pop %v536
    %539 = vrot.lane.b32.xlu0 %v537, 96
    %v540 = vpop.permute.xlu0 %539
    %v542 = vmul.f32 %v524, %v540
    %s543 = scalar_lea.vmem %s0, 14
    %v544 = vld [vmem:[%s543] sm:$0x3]
    %546 = vset.pattern.permute.xlu0 0
    %547 = vperm.xlu0 %546, %v544
    %v548 = vpop.permute.xlu0 %547
    %v550 = vmul.f32 %v548, %v80
    %v552 = vsel %vm132, %v542, 0
    %554 = vmatpush.msra.mxu0 0.0
    %555 = vmatpush.msra.mxu0 0.0
    %556 = vmatpush.msra.mxu0 0.0
    %557 = vmatpush.msra.mxu0 0.0
    %558 = vmatpush.msra.mxu0 0.0
    %559 = vmatpush.msra.mxu0 0.0
    %560 = vmatpush.msra.mxu0 0.0
    %561 = vmatpush.msra.mxu0 0.0
    %562 = vmatpush.msra.mxu0 0.0
    %563 = vmatpush.msra.mxu0 0.0
    %564 = vmatpush.msra.mxu0 0.0
    %565 = vmatpush.msra.mxu0 0.0
    %566 = vmatpush.msra.mxu0 %v69
    %567 = vmatpush.msra.mxu0 %v68
    %568 = vmatpush.msra.mxu0 %v67
    %569 = vmatpush.msra.mxu0 %v66
    %570 = vmatmul.f32.gmra.mxu0 %v552
    %v571 = vpop.f32.mrf.mxu0
    %v572 = vadd.f32 %v550, %v571
    %573 = vdwg.mxu0
    %v574 = vadd.f32 %v572, %v84
    %v575 = vxor.u32 %v574, 2147483648
    %v576 = vmul.f32 %v575, 1.442695
    %v577 = vpow.pop %v576
    %v578 = vadd.f32 %v577, 1.0
    %v579 = vrcp.pop %v578
    %v580 = vmul.f32 %v578, %v579
    %v581 = vsub.f32 1.0, %v580
    %v582 = vmul.f32 %v579, %v581
    %v583 = vadd.f32 %v579, %v582
    %vm584 = vweird.f32 %v578
    %vm585 = vweird.f32 %v579
    %vm586 = vmor %vm584, %vm585
    %v587 = vsel %vm586, %v579, %v583
    %v588 = vand.u32 2147483647, %v578
    %vm589 = vcmp.eq.f32.partialorder %v588, 8.507059e+37
    %v590 = vand.u32 %v578, 2147483648
    %v591 = vor.u32 1.1754944e-38, %v590
    %v592 = vsel %vm589, %v591, %v587
    %v593 = vmul.f32 1.0, %v592
    %v594 = vtanh.pop %v574
    %v595 = vmul.f32 %v593, %v536
    %597 = vrot.lane.b32.xlu0 %v594, 96
    %v598 = vpop.permute.xlu0 %597
    %v600 = vmul.f32 %v593, %v598
    %602 = vrot.lane.b32.xlu0 %v600, 96
    %v603 = vpop.permute.xlu0 %602
    %v605 = vadd.f32 %v595, %v603
    %v606 = vtanh.pop %v605
    %608 = vrot.lane.b32.xlu0 %v606, 96
    %v609 = vpop.permute.xlu0 %608
    %v611 = vmul.f32 %v593, %v609
    %v612 = vld [vmem:[#allocation5] sm:$0xff]
    %v613 = vld [vmem:[#allocation5 + $0x8] sm:$0xff]
    %v614 = vld [vmem:[#allocation5 + $0x10] sm:$0xff]
    %v615 = vld [vmem:[#allocation5 + $0x18] sm:$0xff]
    %v616 = vld [vmem:[%s5] sm:$0x1]
    %v618 = vperm.slane %v616, 0
    %v621 = vsel %vm132, %v611, 0
    %623 = vmatpush.msra.mxu0 0.0
    %624 = vmatpush.msra.mxu0 0.0
    %625 = vmatpush.msra.mxu0 0.0
    %626 = vmatpush.msra.mxu0 0.0
    %627 = vmatpush.msra.mxu0 0.0
    %628 = vmatpush.msra.mxu0 0.0
    %629 = vmatpush.msra.mxu0 0.0
    %630 = vmatpush.msra.mxu0 0.0
    %631 = vmatpush.msra.mxu0 0.0
    %632 = vmatpush.msra.mxu0 0.0
    %633 = vmatpush.msra.mxu0 0.0
    %634 = vmatpush.msra.mxu0 0.0
    %635 = vmatpush.msra.mxu0 %v615
    %636 = vmatpush.msra.mxu0 %v614
    %637 = vmatpush.msra.mxu0 %v613
    %638 = vmatpush.msra.mxu0 %v612
    %639 = vmatmul.f32.gmra.mxu0 %v621
    %v640 = vpop.f32.mrf.mxu0
    %v641 = vadd.f32 %v618, %v640
    %642 = vdwg.mxu0
    %v643 = vxor.u32 %v641, 2147483648
    %v644 = vmul.f32 %v643, 1.442695
    %v645 = vpow.pop %v644
    %v646 = vadd.f32 %v645, 1.0
    %v647 = vrcp.pop %v646
    %v648 = vmul.f32 %v646, %v647
    %v649 = vsub.f32 1.0, %v648
    %v650 = vmul.f32 %v647, %v649
    %v651 = vadd.f32 %v647, %v650
    %vm652 = vweird.f32 %v646
    %vm653 = vweird.f32 %v647
    %vm654 = vmor %vm652, %vm653
    %v655 = vsel %vm654, %v647, %v651
    %v656 = vand.u32 2147483647, %v646
    %vm657 = vcmp.eq.f32.partialorder %v656, 8.507059e+37
    %v658 = vand.u32 %v646, 2147483648
    %v659 = vor.u32 1.1754944e-38, %v658
    %v660 = vsel %vm657, %v659, %v655
    %v661 = vmul.f32 1.0, %v660
    %v662 = vtanh.pop %v641
    %664 = vrot.lane.b32.xlu0 %v605, 96
    %v665 = vpop.permute.xlu0 %664
    %v667 = vmul.f32 %v661, %v665
    %669 = vrot.lane.b32.xlu0 %v662, 112
    %v670 = vpop.permute.xlu0 %669
    %v672 = vmul.f32 %v661, %v670
    %674 = vrot.lane.b32.xlu0 %v672, 112
    %v675 = vpop.permute.xlu0 %674
    %v677 = vadd.f32 %v667, %v675
    %v678 = vtanh.pop %v677
    %680 = vrot.lane.b32.xlu0 %v678, 112
    %v681 = vpop.permute.xlu0 %680
    %v683 = vmul.f32 %v661, %v681
    %v684 = vld [vmem:[%s6] sm:$0x1]
    %v686 = vperm.slane %v684, 0
    %v688 = vmul.f32 %v683, %v686
    %vm689 = vcmask 123904
    %v690 = vsel %vm689, %v688, 0.0
    %691 = vadd.xlane.f32.xlu0 %v690
    %v692 = vpop.xlane.xlu0 %691
    %v693 = vld [vmem:[#allocation2] sm:$0x1]
    %v695 = vperm.slane %v693, 0
    %v697 = vadd.f32 %v692, %v695
    %vm698 = vcmask 1024
    %699 = vst.msk [vmem:[%s9] sm:$0x3] %vm698, %v697
    // Predicated region
    $region46: #{tpu_custom_call.1} parent=1 // pred_check
      _
    $region47: #{tpu_custom_call.1} parent=1 // pred_check_branch
      %701 = sbr.rel (0) target = $region49
    $region48: #{tpu_custom_call.1} parent=1 // pred_region
      _
    $region49: #{tpu_custom_call.1} parent=1 // pred_fallthru
      _
    // Predicated region
    $region50: #{tpu_custom_call.1} parent=1 // pred_check
      _
    $region51: #{tpu_custom_call.1} parent=1 // pred_check_branch
      %703 = sbr.rel (0) target = $region53
    $region52: #{tpu_custom_call.1} parent=1 // pred_region
      _
    $region53: #{tpu_custom_call.1} parent=1 // pred_fallthru
      _
    %704 = vsyncpa [#allocation4], 1
    %705 = vsyncpa [#allocation6], 1

</llo_original>
